<compile_context>
chip_gen: v5e
topology: v5e:2x2
jax: 0.10.0
libtpu: 0.0.40
codegen_flags: <defaults>
</compile_context>

<pallas_src>
import functools

import jax
import jax.numpy as jnp
from jax import lax
from jax.experimental import pallas as pl
from jax.experimental.pallas import tpu as pltpu

_LANE = 128
_VMEM_BUDGET = 48 * 1024 * 1024  # sized for v7x (64 MiB physical VMEM)


def _se_kernel(x_ref, w1_ref, w2_ref, o_ref, *, inv_hw):
    # x_ref: (Bt, C, HWp)  -- HWp is HW zero-padded to a multiple of 128.
    # w1_ref: (Cr, C), w2_ref: (C, Cr)  (PyTorch Linear weight layout: (out, in))
    x = x_ref[...]

    # Global average pool over the (padded) spatial dim.  Padded zeros add
    # nothing to the sum; divide by the true HW supplied by the wrapper.
    pooled = jnp.sum(x.astype(jnp.float32), axis=2) * inv_hw          # (Bt, C)

    # fc1: pooled @ W1^T -> (Bt, Cr), ReLU.  Contract on the last dim of both
    # operands (== trans_b matmul), f32 accumulation on the MXU.
    h = lax.dot_general(pooled, w1_ref[...],
                        dimension_numbers=(((1,), (1,)), ((), ())),
                        preferred_element_type=jnp.float32)
    h = jnp.maximum(h, 0.0)

    # fc2: h @ W2^T -> (Bt, C), Sigmoid.
    s = lax.dot_general(h, w2_ref[...],
                        dimension_numbers=(((1,), (1,)), ((), ())),
                        preferred_element_type=jnp.float32)
    s = jax.nn.sigmoid(s)                                             # (Bt, C)

    # Channel-wise rescale broadcast over the spatial (lane) dim.
    o_ref[...] = (x.astype(jnp.float32) * s[:, :, None]).astype(o_ref.dtype)


def _largest_divisor_leq(n, cap):
    cap = max(1, min(n, cap))
    best = 1
    for d in range(1, cap + 1):
        if n % d == 0:
            best = d
    return best


def se_layer(x, w1, w2):
    """SELayer forward. x: (B, C, H, W); w1: (C//r, C); w2: (C, C//r)."""
    B, C, H, W = x.shape
    Cr = w1.shape[0]
    HW = H * W

    # Lane-dense minor dim: pad HW up to a multiple of 128 (zeros are exact for
    # the sum; pad columns of the output are sliced off below).
    HWp = ((HW + _LANE - 1) // _LANE) * _LANE
    x_flat = x.reshape(B, C, HW)
    if HWp != HW:
        x_flat = jnp.pad(x_flat, ((0, 0), (0, 0), (0, HWp - HW)))

    # Batch elements per grid step:
    #   VMEM use ~= (in + out) * double-buffer = 4 * Bt * C * HWp * itemsize.
    #   Keep >= 2 grid steps when B >= 2 (megacore sharding / pipelining).
    per_elem_bytes = C * HWp * x.dtype.itemsize
    bt_vmem = max(1, _VMEM_BUDGET // (4 * per_elem_bytes))
    bt_cap = min(B, bt_vmem)
    if B >= 2:
        bt_cap = min(bt_cap, max(1, B // 2))
    Bt = _largest_divisor_leq(B, bt_cap)
    grid_b = B // Bt

    # Explicit scoped-VMEM limit with headroom, clamped under v7x's 64 MiB.
    needed = 4 * Bt * per_elem_bytes + (w1.size + w2.size) * 4 + (1 << 20)
    vmem_limit = int(min(max(needed, 32 * 1024 * 1024), 56 * 1024 * 1024))
    # TODO(synk): if a single (C, HWp) slab ever exceeds the VMEM budget, switch
    # to a two-pass structure (spatially tiled pool+FC, then tiled rescale).

    kernel = functools.partial(_se_kernel, inv_hw=1.0 / HW)

    out_flat = pl.pallas_call(
        kernel,
        out_shape=jax.ShapeDtypeStruct((B, C, HWp), x.dtype),
        grid_spec=pltpu.PrefetchScalarGridSpec(
            num_scalar_prefetch=0,
            grid=(grid_b,),
            in_specs=[
                pl.BlockSpec((Bt, C, HWp), lambda b: (b, 0, 0)),
                pl.BlockSpec((Cr, C), lambda b: (0, 0)),   # resident weights
                pl.BlockSpec((C, Cr), lambda b: (0, 0)),   # resident weights
            ],
            out_specs=pl.BlockSpec((Bt, C, HWp), lambda b: (b, 0, 0)),
        ),
        compiler_params=pltpu.CompilerParams(
            dimension_semantics=("parallel",),
            vmem_limit_bytes=vmem_limit),
    )(x_flat, w1, w2)

    return out_flat[:, :, :HW].reshape(B, C, H, W)


def se_layer_ref(x, w1, w2):
    """Pure-JAX reference mirroring the PyTorch forward."""
    y = jnp.mean(x, axis=(2, 3))                       # (B, C)
    y = jnp.maximum(y @ w1.T, 0.0)                     # (B, C//r)
    y = jax.nn.sigmoid(y @ w2.T)                       # (B, C)
    return x * y[:, :, None, None]


if __name__ == "__main__":
    # Small shapes consistent with the module: channel=64, reduction=16.
    B, C, H, W = 2, 64, 8, 8
    reduction = 16
    Cr = C // reduction  # 4

    key = jax.random.PRNGKey(0)
    kx, k1, k2 = jax.random.split(key, 3)

    x = jax.random.normal(kx, (B, C, H, W), dtype=jnp.float32)
    # PyTorch Linear weight shapes: (out_features, in_features), bias=False.
    w1 = jax.random.normal(k1, (Cr, C), dtype=jnp.float32) * 0.1
    w2 = jax.random.normal(k2, (C, Cr), dtype=jnp.float32) * 0.1

    out = jax.block_until_ready(se_layer(x, w1, w2))
    ref = jax.block_until_ready(se_layer_ref(x, w1, w2))

    assert out.shape == (B, C, H, W)
    assert jnp.allclose(out, ref, atol=1e-5, rtol=1e-5), "mismatch vs reference"
    print("KERNEL_OK")
</pallas_src>

<mosaic_0001>
module attributes {stable_mosaic.version = 11 : i64} {
  func.func @_se_kernel(%arg0: i32, %arg1: memref<1x64x128xf32, #tpu.memory_space<vmem>>, %arg2: memref<4x64xf32, #tpu.memory_space<vmem>>, %arg3: memref<64x4xf32, #tpu.memory_space<vmem>>, %arg4: memref<1x64x128xf32, #tpu.memory_space<vmem>>) attributes {dimension_semantics = [#tpu.dimension_semantics<parallel>], iteration_bounds = array<i64: 2>, scalar_prefetch = 0 : i64, scratch_operands = 0 : i64, tpu.core_type = #tpu.core_type<tc>, window_params = [{transform_indices = @transform_0, window_bounds = array<i64: 1, 64, 128>}, {pipeline_mode = #tpu.pipeline_mode<synchronous>, transform_indices = @transform_1, window_bounds = array<i64: 4, 64>}, {pipeline_mode = #tpu.pipeline_mode<synchronous>, transform_indices = @transform_2, window_bounds = array<i64: 64, 4>}, {transform_indices = @transform_3, window_bounds = array<i64: 1, 64, 128>}]} {
    %c0 = arith.constant 0 : index
    %c0_0 = arith.constant 0 : index
    %c0_1 = arith.constant 0 : index
    %0 = vector.load %arg1[%c0, %c0_0, %c0_1] : memref<1x64x128xf32, #tpu.memory_space<vmem>>, vector<1x64x128xf32>
    %cst = arith.constant dense<0.000000e+00> : vector<1x64xf32>
    %1 = vector.multi_reduction <add>, %0, %cst [2] : vector<1x64x128xf32> to vector<1x64xf32>
    %cst_2 = arith.constant 1.562500e-02 : f32
    %2 = vector.broadcast %cst_2 : f32 to vector<1x64xf32>
    %3 = arith.mulf %1, %2 : vector<1x64xf32>
    %c0_3 = arith.constant 0 : index
    %c0_4 = arith.constant 0 : index
    %4 = vector.load %arg2[%c0_3, %c0_4] : memref<4x64xf32, #tpu.memory_space<vmem>>, vector<4x64xf32>
    %cst_5 = arith.constant dense<0.000000e+00> : vector<1x4xf32>
    %5 = tpu.matmul %3, %4, %cst_5 {dimension_numbers = #tpu.dot_dimension_numbers<[1], [1], [0], [0], [0, 0, 1, 0], [], []>} : vector<1x64xf32>, vector<4x64xf32>, vector<1x4xf32> -> vector<1x4xf32>
    %cst_6 = arith.constant 0.000000e+00 : f32
    %6 = vector.broadcast %cst_6 : f32 to vector<1x4xf32>
    %7 = arith.maximumf %5, %6 : vector<1x4xf32>
    %c0_7 = arith.constant 0 : index
    %c0_8 = arith.constant 0 : index
    %8 = vector.load %arg3[%c0_7, %c0_8] : memref<64x4xf32, #tpu.memory_space<vmem>>, vector<64x4xf32>
    %cst_9 = arith.constant dense<0.000000e+00> : vector<1x64xf32>
    %9 = tpu.matmul %7, %8, %cst_9 {dimension_numbers = #tpu.dot_dimension_numbers<[1], [1], [0], [0], [0, 0, 1, 0], [], []>} : vector<1x4xf32>, vector<64x4xf32>, vector<1x64xf32> -> vector<1x64xf32>
    %10 = arith.negf %9 : vector<1x64xf32>
    %11 = math.exp %10 : vector<1x64xf32>
    %cst_10 = arith.constant 1.000000e+00 : f32
    %12 = vector.broadcast %cst_10 : f32 to vector<1x64xf32>
    %13 = arith.addf %12, %11 : vector<1x64xf32>
    %14 = arith.divf %12, %13 : vector<1x64xf32>
    %15 = vector.shape_cast %14 : vector<1x64xf32> to vector<1x64x1xf32>
    %16 = vector.broadcast %15 : vector<1x64x1xf32> to vector<1x64x128xf32>
    %17 = arith.mulf %0, %16 : vector<1x64x128xf32>
    %c0_11 = arith.constant 0 : index
    %c0_12 = arith.constant 0 : index
    %c0_13 = arith.constant 0 : index
    %18 = vector.load %arg4[%c0_11, %c0_12, %c0_13] : memref<1x64x128xf32, #tpu.memory_space<vmem>>, vector<1x64x128xf32>
    tpu.vector_store %arg4[%c0_11, %c0_12, %c0_13], %17 {strides = array<i32>} : memref<1x64x128xf32, #tpu.memory_space<vmem>>, vector<1x64x128xf32>,
    return
  }
  func.func @transform_0(%arg0: i32) -> (i32, i32, i32) {
    %c0_i32 = arith.constant 0 : i32
    %c0_i32_0 = arith.constant 0 : i32
    %c0_i32_1 = arith.constant 0 : i32
    return %arg0, %c0_i32, %c0_i32_0 : i32, i32, i32
  }
  func.func @transform_1(%arg0: i32) -> (i32, i32) {
    %c0_i32 = arith.constant 0 : i32
    %c0_i32_0 = arith.constant 0 : i32
    %c0_i32_1 = arith.constant 0 : i32
    return %c0_i32, %c0_i32_0 : i32, i32
  }
  func.func @transform_2(%arg0: i32) -> (i32, i32) {
    %c0_i32 = arith.constant 0 : i32
    %c0_i32_0 = arith.constant 0 : i32
    %c0_i32_1 = arith.constant 0 : i32
    return %c0_i32, %c0_i32_0 : i32, i32
  }
  func.func @transform_3(%arg0: i32) -> (i32, i32, i32) {
    %c0_i32 = arith.constant 0 : i32
    %c0_i32_0 = arith.constant 0 : i32
    %c0_i32_1 = arith.constant 0 : i32
    return %arg0, %c0_i32, %c0_i32_0 : i32, i32, i32
  }
}

</mosaic_0001>

<llo_original>
// kernel: tpu_custom_call.1
$region0: #{tpu_custom_call.1}
  #allocation0 [shape = 'u32[]', space=smem, size = 0x4, offset = 0x4, fixed_abs, tag = 'smem constant byte address 0x4 - core index']
  #allocation1 [shape = 'u32[72,128]{1,0:T(1,128)}', space=vmem, size = 0x9000, scoped, tag = 'internal scratch']
  %s0 = inlined_call_operand.hbm [shape: f32[2,64,128], index: 0, kind: input, shape index: {}]
  %s1 = inlined_call_operand.vmem [shape: f32[4,64], index: 1, kind: input, shape index: {}]
  %s2 = inlined_call_operand.vmem [shape: f32[64,4], index: 2, kind: input, shape index: {}]
  %s3 = inlined_call_operand.hbm [shape: f32[2,64,128], index: 3, kind: output, shape index: {}]
  %s4 = sld [smem:[#allocation0]]
  $region49: #{tpu_custom_call.1} parent=0
    _
  %s6 = ssub.s32 1, %s4
  %s7 = scalar_select 0, %s6, %s4
  $region1: #{tpu_custom_call.1} parent=0
    #allocation2 [shape = 'u8[65536]{0}', space=vmem, size = 0x10000, scoped, tag = 'input window, operand 0']
    #allocation3 [shape = 's32[2]{0}', space=sflag, size = 0x8, scoped, tag = 'scoped memory for tpu_custom_call.1']
    #allocation4 [shape = 's32[2]{0}', space=sflag, size = 0x8, scoped, tag = 'scoped memory for tpu_custom_call.1']
    #allocation5 [shape = 'u8[65536]{0}', space=vmem, size = 0x10000, scoped, tag = 'output window, operand 0']
    %8 = vsyncpa [#allocation3], 0
    %s9 = scalar_lea.sflag [#allocation3], 1
    %10 = vsyncpa %s9, 0
    %11 = vsyncpa [#allocation4], 0
    %s12 = scalar_lea.sflag [#allocation4], 1
    %13 = vsyncpa %s12, 0
    loop: start=0, step=1, limit=4
    $region2: #{tpu_custom_call.1} parent=1 // loop_pre_header
      _
    $region3: #{tpu_custom_call.1} parent=1 // loop_header
      %s15 = sphi 0, %s19
      %p16 = scmp.ge.s32.totalorder %s15, 4
      %s25 = sphi 0, %s27
      %s28 = sphi 0, %s25
      %s29 = sphi 0, %s28
      %s45 = sphi 0, %s29
      %s49 = sphi 0, %s49
      %s51 = sphi 0, %s49
      %s52 = sphi 0, %s51
      %s66 = sphi 0, %s52
      %s70 = sphi 0, %s70
      %s72 = sphi 0, %s70
      %s73 = sphi 0, %s72
      %s87 = sphi 0, %s73
      %s93 = sphi 0, %s95
      %s96 = sphi 0, %s93
      %s97 = sphi 0, %s96
      %s113 = sphi 0, %s97
    $region4: #{tpu_custom_call.1} parent=1 // loop_header_branch
      %18 = sbr.rel (%p16) target = $region8
    $region5: #{tpu_custom_call.1} parent=1 // loop_body
      %s20 = ssub.s32 %s15, 1
      %s21 = ssub.s32 %s15, 2
      %s22 = sadd.s32 %s15, 1
      %s23 = ssub.s32 %s15, %s22
      %p24 = scmp.eq.s32.totalorder %s23, 0
      %s26 = sadd.s32 %s25, 1
      %s27 = scalar_select %p24, %s25, %s26
      %p30 = pneg %p24
      %p31 = scmp.eq.s32.totalorder %s15, 1
      %p32 = por %p30, %p31
      %p33 = scmp.ne.s32.totalorder %s25, %s28
      %p34 = scmp.eq.s32.totalorder %s15, 0
      %p35 = por %p33, %p34
      %p36 = scmp.ne.s32.totalorder %s25, %s28
      %p37 = scmp.eq.s32.totalorder %s20, 1
      %p38 = por %p36, %p37
      %p39 = scmp.ne.s32.totalorder %s28, %s29
      %p40 = scmp.eq.s32.totalorder %s20, 0
      %p41 = por %p39, %p40
      %p42 = scmp.ne.s32.totalorder %s28, %s29
      %p43 = scmp.eq.s32.totalorder %s21, 1
      %p44 = por %p42, %p43
      %p46 = scmp.ne.s32.totalorder %s29, %s45
      %p47 = scmp.eq.s32.totalorder %s21, 0
      %p48 = por %p46, %p47
      %s50 = sadd.s32 %s49, 1
      %p53 = scmp.eq.s32.totalorder %s15, 1
      %p54 = scmp.ne.s32.totalorder %s49, %s51
      %p55 = scmp.eq.s32.totalorder %s15, 0
      %p56 = por %p54, %p55
      %p57 = scmp.ne.s32.totalorder %s49, %s51
      %p58 = scmp.eq.s32.totalorder %s20, 1
      %p59 = por %p57, %p58
      %p60 = scmp.ne.s32.totalorder %s51, %s52
      %p61 = scmp.eq.s32.totalorder %s20, 0
      %p62 = por %p60, %p61
      %p63 = scmp.ne.s32.totalorder %s51, %s52
      %p64 = scmp.eq.s32.totalorder %s21, 1
      %p65 = por %p63, %p64
      %p67 = scmp.ne.s32.totalorder %s52, %s66
      %p68 = scmp.eq.s32.totalorder %s21, 0
      %p69 = por %p67, %p68
      %s71 = sadd.s32 %s70, 1
      %p74 = scmp.eq.s32.totalorder %s15, 1
      %p75 = scmp.ne.s32.totalorder %s70, %s72
      %p76 = scmp.eq.s32.totalorder %s15, 0
      %p77 = por %p75, %p76
      %p78 = scmp.ne.s32.totalorder %s70, %s72
      %p79 = scmp.eq.s32.totalorder %s20, 1
      %p80 = por %p78, %p79
      %p81 = scmp.ne.s32.totalorder %s72, %s73
      %p82 = scmp.eq.s32.totalorder %s20, 0
      %p83 = por %p81, %p82
      %p84 = scmp.ne.s32.totalorder %s72, %s73
      %p85 = scmp.eq.s32.totalorder %s21, 1
      %p86 = por %p84, %p85
      %p88 = scmp.ne.s32.totalorder %s73, %s87
      %p89 = scmp.eq.s32.totalorder %s21, 0
      %p90 = por %p88, %p89
      %s91 = ssub.s32 %s15, %s22
      %p92 = scmp.eq.s32.totalorder %s91, 0
      %s94 = sadd.s32 %s93, 1
      %s95 = scalar_select %p92, %s93, %s94
      %p98 = pneg %p92
      %p99 = scmp.eq.s32.totalorder %s15, 1
      %p100 = por %p98, %p99
      %p101 = scmp.ne.s32.totalorder %s93, %s96
      %p102 = scmp.eq.s32.totalorder %s15, 0
      %p103 = por %p101, %p102
      %p104 = scmp.ne.s32.totalorder %s93, %s96
      %p105 = scmp.eq.s32.totalorder %s20, 1
      %p106 = por %p104, %p105
      %p107 = scmp.ne.s32.totalorder %s96, %s97
      %p108 = scmp.eq.s32.totalorder %s20, 0
      %p109 = por %p107, %p108
      %p110 = scmp.ne.s32.totalorder %s96, %s97
      %p111 = scmp.eq.s32.totalorder %s21, 1
      %p112 = por %p110, %p111
      %p114 = scmp.ne.s32.totalorder %s97, %s113
      %p115 = scmp.eq.s32.totalorder %s21, 0
      %p116 = por %p114, %p115
      %p117 = scmp.le.s32.totalorder 1, %s15
      %p118 = scmp.lt.s32.totalorder %s15, 3
      %p119 = pnand %p117, %p118
      %p120 = pneg %p119
      // Predicated region
      $region9: #{tpu_custom_call.1} parent=5 // pred_check
        _
      $region10: #{tpu_custom_call.1} parent=5 // pred_check_branch
        %122 = sbr.rel (%p119) target = $region12
      $region11: #{tpu_custom_call.1} parent=5 // pred_region
        %s123 = ssub.s32 %s15, 1
        // Predicated region
        $region13: #{tpu_custom_call.1} parent=11 // pred_check
          %p124 = pneg %p62
        $region14: #{tpu_custom_call.1} parent=11 // pred_check_branch
          %126 = sbr.rel (%p124) target = $region16
        $region15: #{tpu_custom_call.1} parent=11 // pred_region
          _
        $region16: #{tpu_custom_call.1} parent=11 // pred_fallthru
          _
        // Predicated region
        $region17: #{tpu_custom_call.1} parent=11 // pred_check
          %p127 = pneg %p83
        $region18: #{tpu_custom_call.1} parent=11 // pred_check_branch
          %129 = sbr.rel (%p127) target = $region20
        $region19: #{tpu_custom_call.1} parent=11 // pred_region
          _
        $region20: #{tpu_custom_call.1} parent=11 // pred_fallthru
          _
      $region12: #{tpu_custom_call.1} parent=5 // pred_fallthru
        _
      %p130 = scmp.lt.s32.totalorder %s15, 2
      // Predicated region
      $region21: #{tpu_custom_call.1} parent=5 // pred_check
        %p131 = pneg %p130
      $region22: #{tpu_custom_call.1} parent=5 // pred_check_branch
        %133 = sbr.rel (%p131) target = $region24
      $region23: #{tpu_custom_call.1} parent=5 // pred_region
        // Predicated region
        $region25: #{tpu_custom_call.1} parent=23 // pred_check
          %p134 = pneg %p35
        $region26: #{tpu_custom_call.1} parent=23 // pred_check_branch
          %136 = sbr.rel (%p134) target = $region28
        $region27: #{tpu_custom_call.1} parent=23 // pred_region
          %s137 = sand.u32 %s25, 1
          %s138 = scalar_lea.sflag [#allocation3], %s137
          %s139 = sand.u32 %s25, 1
          %s140 = smul.addr %s139, 64
          %s141 = scalar_lea.vmem [#allocation2], %s140
          %143 = vsyncadd %s138, 0
          %s144 = smul.addr %s15, 8
          %s145 = smul.addr %s144, 8
          %s146 = scalar_lea.hbm %s0, %s145
          %s147 = sshll.u32 %s146, 4
          %s148 = int_to_ptr.hbm [resolvable:$true] %s147
          %s149 = sshll.u32 %s141, 4
          %s150 = int_to_ptr.vmem [resolvable:$true] %s149
          %155 = dma.hbm_to_vmem [thread:$0]  %s148, 1024, %s150, %s138, 128, 128, 8
        $region28: #{tpu_custom_call.1} parent=23 // pred_fallthru
          _
      $region24: #{tpu_custom_call.1} parent=5 // pred_fallthru
        _
      %p156 = scmp.le.s32.totalorder 1, %s15
      %p157 = scmp.lt.s32.totalorder %s15, 3
      %p158 = pnand %p156, %p157
      %p159 = pneg %p158
      // Predicated region
      $region29: #{tpu_custom_call.1} parent=5 // pred_check
        _
      $region30: #{tpu_custom_call.1} parent=5 // pred_check_branch
        %161 = sbr.rel (%p158) target = $region32
      $region31: #{tpu_custom_call.1} parent=5 // pred_region
        %s162 = ssub.s32 %s15, 1
        %s163 = sand.u32 %s28, 1
        %s164 = scalar_lea.sflag [#allocation3], %s163
        %s165 = sand.u32 %s28, 1
        %s166 = smul.addr %s165, 64
        %s167 = scalar_lea.vmem [#allocation2], %s166
        // Predicated region
        $region33: #{tpu_custom_call.1} parent=31 // pred_check
          %p168 = pneg %p41
        $region34: #{tpu_custom_call.1} parent=31 // pred_check_branch
          %170 = sbr.rel (%p168) target = $region36
        $region35: #{tpu_custom_call.1} parent=31 // pred_region
          %172 = dma.done %s164, 1024
        $region36: #{tpu_custom_call.1} parent=31 // pred_fallthru
          _
        %s173 = sand.u32 %s28, 1
        %s174 = scalar_lea.sflag [#allocation3], %s173
        %s175 = sand.u32 %s28, 1
        %s176 = smul.addr %s175, 64
        %s177 = scalar_lea.vmem [#allocation2], %s176
        %p178 = pneg %p41
        %p179 = pneg %p38
        %p180 = pneg %p62
        %p181 = pneg %p59
        %p182 = pneg %p83
        %p183 = pneg %p80
        %p184 = pneg %p109
        %p185 = pneg %p106
        %s186 = sand.u32 %s96, 1
        %s187 = scalar_lea.sflag [#allocation4], %s186
        %s188 = sand.u32 %s96, 1
        %s189 = smul.addr %s188, 64
        %s190 = scalar_lea.vmem [#allocation5], %s189
        %v191 = vld [vmem:[%s167] sm:$0xff]
        %v192 = vld [vmem:[%s167 + $0x8] sm:$0xff]
        %v193 = vld [vmem:[%s167 + $0x10] sm:$0xff]
        %v194 = vld [vmem:[%s167 + $0x18] sm:$0xff]
        %v195 = vld [vmem:[%s167 + $0x20] sm:$0xff]
        %v196 = vld [vmem:[%s167 + $0x28] sm:$0xff]
        %v197 = vld [vmem:[%s167 + $0x30] sm:$0xff]
        %v198 = vld [vmem:[%s167 + $0x38] sm:$0xff]
        %199 = vadd.xlane.f32.xlu0 %v191
        %v200 = vpop.xlane.xlu0 %199
        %201 = vadd.xlane.f32.xlu0 %v192
        %v202 = vpop.xlane.xlu0 %201
        %203 = vadd.xlane.f32.xlu0 %v193
        %v204 = vpop.xlane.xlu0 %203
        %205 = vadd.xlane.f32.xlu0 %v194
        %v206 = vpop.xlane.xlu0 %205
        %207 = vadd.xlane.f32.xlu0 %v195
        %v208 = vpop.xlane.xlu0 %207
        %209 = vadd.xlane.f32.xlu0 %v196
        %v210 = vpop.xlane.xlu0 %209
        %211 = vadd.xlane.f32.xlu0 %v197
        %v212 = vpop.xlane.xlu0 %211
        %213 = vadd.xlane.f32.xlu0 %v198
        %v214 = vpop.xlane.xlu0 %213
        %v215 = vmul.f32 %v200, 0.015625
        %v216 = vmul.f32 %v202, 0.015625
        %v217 = vmul.f32 %v204, 0.015625
        %v218 = vmul.f32 %v206, 0.015625
        %v219 = vmul.f32 %v208, 0.015625
        %v220 = vmul.f32 %v210, 0.015625
        %v221 = vmul.f32 %v212, 0.015625
        %v222 = vmul.f32 %v214, 0.015625
        %v223 = vld [vmem:[%s1] sm:$0xf]
        %v232 = vlaneseq
        %v233 = vand.u32 %v232, 127
        %v234 = vperm.slane %v215, %v233
        %v235 = vadd.s32 %v233, 4294967288
        %v236 = vperm.slane %v216, %v235
        %vm237 = vcmask 130112
        %v238 = vsel %vm237, %v236, %v234
        %v239 = vadd.s32 %v233, 4294967280
        %v240 = vperm.slane %v217, %v239
        %vm241 = vcmask 195712
        %v242 = vsel %vm241, %v240, %v238
        %v243 = vadd.s32 %v233, 4294967272
        %v244 = vperm.slane %v218, %v243
        %vm245 = vcmask 261312
        %v246 = vsel %vm245, %v244, %v242
        %v247 = vadd.s32 %v233, 4294967264
        %v248 = vperm.slane %v219, %v247
        %vm249 = vcmask 326912
        %v250 = vsel %vm249, %v248, %v246
        %v251 = vadd.s32 %v233, 4294967256
        %v252 = vperm.slane %v220, %v251
        %vm253 = vcmask 392512
        %v254 = vsel %vm253, %v252, %v250
        %v255 = vadd.s32 %v233, 4294967248
        %v256 = vperm.slane %v221, %v255
        %vm257 = vcmask 458112
        %v258 = vsel %vm257, %v256, %v254
        %v259 = vadd.s32 %v233, 4294967240
        %v260 = vperm.slane %v222, %v259
        %vm261 = vcmask 523712
        %v262 = vsel %vm261, %v260, %v258
        %vm263 = vcmask 523264
        %v264 = vsel %vm263, %v262, 0
        %v267 = vsel %vm263, %v223, 0
        %269 = vmatpush.xpose.msra.mxu0 0.0
        %270 = vmatpush.xpose.msra.mxu0 0.0
        %271 = vmatpush.xpose.msra.mxu0 0.0
        %272 = vmatpush.xpose.msra.mxu0 0.0
        %273 = vmatpush.xpose.msra.mxu0 0.0
        %274 = vmatpush.xpose.msra.mxu0 0.0
        %275 = vmatpush.xpose.msra.mxu0 0.0
        %276 = vmatpush.xpose.msra.mxu0 0.0
        %277 = vmatpush.xpose.msra.mxu0 0.0
        %278 = vmatpush.xpose.msra.mxu0 0.0
        %279 = vmatpush.xpose.msra.mxu0 0.0
        %280 = vmatpush.xpose.msra.mxu0 0.0
        %281 = vmatpush.xpose.msra.mxu0 0.0
        %282 = vmatpush.xpose.msra.mxu0 0.0
        %283 = vmatpush.xpose.msra.mxu0 0.0
        %284 = vmatpush.xpose.msra.mxu0 %v267
        %285 = vmatmul.f32.gmra.mxu0 %v264
        %v286 = vpop.f32.mrf.mxu0
        %v287 = vadd.f32 0.0, %v286
        %288 = vdwg.mxu0
        %v289 = vmax.f32 %v287, 0.0
        %v290 = vld [vmem:[%s2] sm:$0xff]
        %v291 = vld [vmem:[%s2 + $0x8] sm:$0xff]
        %v292 = vld [vmem:[%s2 + $0x10] sm:$0xff]
        %v293 = vld [vmem:[%s2 + $0x18] sm:$0xff]
        %v294 = vld [vmem:[%s2 + $0x20] sm:$0xff]
        %v295 = vld [vmem:[%s2 + $0x28] sm:$0xff]
        %v296 = vld [vmem:[%s2 + $0x30] sm:$0xff]
        %v297 = vld [vmem:[%s2 + $0x38] sm:$0xff]
        %vm298 = vcmask 31744
        %v300 = vsel %vm298, %v289, 0
        %v303 = vsel %vm298, %v290, 0
        %v306 = vsel %vm298, %v291, 0
        %v309 = vsel %vm298, %v292, 0
        %v312 = vsel %vm298, %v293, 0
        %v315 = vsel %vm298, %v294, 0
        %v318 = vsel %vm298, %v295, 0
        %v321 = vsel %vm298, %v296, 0
        %v324 = vsel %vm298, %v297, 0
        %326 = vmatpush.xpose.msra.mxu0 0.0
        %327 = vmatpush.xpose.msra.mxu0 0.0
        %328 = vmatpush.xpose.msra.mxu0 0.0
        %329 = vmatpush.xpose.msra.mxu0 0.0
        %330 = vmatpush.xpose.msra.mxu0 0.0
        %331 = vmatpush.xpose.msra.mxu0 0.0
        %332 = vmatpush.xpose.msra.mxu0 0.0
        %333 = vmatpush.xpose.msra.mxu0 0.0
        %334 = vmatpush.xpose.msra.mxu0 %v324
        %335 = vmatpush.xpose.msra.mxu0 %v321
        %336 = vmatpush.xpose.msra.mxu0 %v318
        %337 = vmatpush.xpose.msra.mxu0 %v315
        %338 = vmatpush.xpose.msra.mxu0 %v312
        %339 = vmatpush.xpose.msra.mxu0 %v309
        %340 = vmatpush.xpose.msra.mxu0 %v306
        %341 = vmatpush.xpose.msra.mxu0 %v303
        %342 = vmatmul.f32.gmra.mxu0 %v300
        %v343 = vpop.f32.mrf.mxu0
        %v344 = vadd.f32 0.0, %v343
        %345 = vdwg.mxu0
        %v346 = vxor.u32 %v344, 2147483648
        %v347 = vmul.f32 %v346, 1.442695
        %v348 = vpow.pop %v347
        %v349 = vadd.f32 %v348, 1.0
        %v350 = vrcp.pop %v349
        %v351 = vmul.f32 %v349, %v350
        %v352 = vsub.f32 1.0, %v351
        %v353 = vmul.f32 %v350, %v352
        %v354 = vadd.f32 %v350, %v353
        %vm355 = vweird.f32 %v349
        %vm356 = vweird.f32 %v350
        %vm357 = vmor %vm355, %vm356
        %v358 = vsel %vm357, %v350, %v354
        %v359 = vand.u32 2147483647, %v349
        %vm360 = vcmp.eq.f32.partialorder %v359, 8.507059e+37
        %v361 = vand.u32 %v349, 2147483648
        %v362 = vor.u32 1.1754944e-38, %v361
        %v363 = vsel %vm360, %v362, %v358
        %v364 = vmul.f32 1.0, %v363
        %v365 = vperm.slane %v364, 0
        %v366 = vlaneseq
        %v367 = vshrl.u32 %v366, 7
        %369 = vset.pattern.permute.xlu0 %v367
        %370 = vperm.xlu0 %369, %v365
        %v371 = vpop.permute.xlu0 %370
        %v372 = vlaneseq
        %v373 = vshrl.u32 %v372, 7
        %v374 = vadd.s32 %v373, 8
        %375 = vset.pattern.permute.xlu0 %v374
        %376 = vperm.xlu0 %375, %v365
        %v377 = vpop.permute.xlu0 %376
        %v378 = vlaneseq
        %v379 = vshrl.u32 %v378, 7
        %v380 = vadd.s32 %v379, 16
        %381 = vset.pattern.permute.xlu0 %v380
        %382 = vperm.xlu0 %381, %v365
        %v383 = vpop.permute.xlu0 %382
        %v384 = vlaneseq
        %v385 = vshrl.u32 %v384, 7
        %v386 = vadd.s32 %v385, 24
        %387 = vset.pattern.permute.xlu0 %v386
        %388 = vperm.xlu0 %387, %v365
        %v389 = vpop.permute.xlu0 %388
        %v390 = vlaneseq
        %v391 = vshrl.u32 %v390, 7
        %v392 = vadd.s32 %v391, 32
        %393 = vset.pattern.permute.xlu0 %v392
        %394 = vperm.xlu0 %393, %v365
        %v395 = vpop.permute.xlu0 %394
        %v396 = vlaneseq
        %v397 = vshrl.u32 %v396, 7
        %v398 = vadd.s32 %v397, 40
        %399 = vset.pattern.permute.xlu0 %v398
        %400 = vperm.xlu0 %399, %v365
        %v401 = vpop.permute.xlu0 %400
        %v402 = vlaneseq
        %v403 = vshrl.u32 %v402, 7
        %v404 = vadd.s32 %v403, 48
        %405 = vset.pattern.permute.xlu0 %v404
        %406 = vperm.xlu0 %405, %v365
        %v407 = vpop.permute.xlu0 %406
        %v408 = vlaneseq
        %v409 = vshrl.u32 %v408, 7
        %v410 = vadd.s32 %v409, 56
        %411 = vset.pattern.permute.xlu0 %v410
        %412 = vperm.xlu0 %411, %v365
        %v413 = vpop.permute.xlu0 %412
        %v414 = vmul.f32 %v191, %v371
        %v415 = vmul.f32 %v192, %v377
        %v416 = vmul.f32 %v193, %v383
        %v417 = vmul.f32 %v194, %v389
        %v418 = vmul.f32 %v195, %v395
        %v419 = vmul.f32 %v196, %v401
        %v420 = vmul.f32 %v197, %v407
        %v421 = vmul.f32 %v198, %v413
        %422 = vst [vmem:[%s190] sm:$0xff] %v414
        %423 = vst [vmem:[%s190 + $0x8] sm:$0xff] %v415
        %424 = vst [vmem:[%s190 + $0x10] sm:$0xff] %v416
        %425 = vst [vmem:[%s190 + $0x18] sm:$0xff] %v417
        %426 = vst [vmem:[%s190 + $0x20] sm:$0xff] %v418
        %427 = vst [vmem:[%s190 + $0x28] sm:$0xff] %v419
        %428 = vst [vmem:[%s190 + $0x30] sm:$0xff] %v420
        %429 = vst [vmem:[%s190 + $0x38] sm:$0xff] %v421
        %s430 = sand.u32 %s96, 1
        %s431 = scalar_lea.sflag [#allocation4], %s430
        %s432 = sand.u32 %s96, 1
        %s433 = smul.addr %s432, 64
        %s434 = scalar_lea.vmem [#allocation5], %s433
        // Predicated region
        $region37: #{tpu_custom_call.1} parent=31 // pred_check
          %p435 = pneg %p106
        $region38: #{tpu_custom_call.1} parent=31 // pred_check_branch
          %437 = sbr.rel (%p435) target = $region40
        $region39: #{tpu_custom_call.1} parent=31 // pred_region
          %439 = vsyncadd %s431, 0
          %s440 = smul.addr %s20, 8
          %s441 = smul.addr %s440, 8
          %s442 = scalar_lea.hbm %s3, %s441
          %s443 = sshll.u32 %s434, 4
          %s444 = int_to_ptr.vmem [resolvable:$true] %s443
          %s445 = sshll.u32 %s442, 4
          %s446 = int_to_ptr.hbm [resolvable:$true] %s445
          %451 = dma.vmem_to_hbm [thread:$0]  %s444, 1024, %s446, %s431, 128, 128, 8
        $region40: #{tpu_custom_call.1} parent=31 // pred_fallthru
          _
      $region32: #{tpu_custom_call.1} parent=5 // pred_fallthru
        _
      %p452 = scmp.le.s32.totalorder 2, %s15
      // Predicated region
      $region41: #{tpu_custom_call.1} parent=5 // pred_check
        %p453 = pneg %p452
      $region42: #{tpu_custom_call.1} parent=5 // pred_check_branch
        %455 = sbr.rel (%p453) target = $region44
      $region43: #{tpu_custom_call.1} parent=5 // pred_region
        %s456 = ssub.s32 %s15, 2
        // Predicated region
        $region45: #{tpu_custom_call.1} parent=43 // pred_check
          %p457 = pneg %p112
        $region46: #{tpu_custom_call.1} parent=43 // pred_check_branch
          %459 = sbr.rel (%p457) target = $region48
        $region47: #{tpu_custom_call.1} parent=43 // pred_region
          %s460 = sand.u32 %s97, 1
          %s461 = scalar_lea.sflag [#allocation4], %s460
          %s462 = sand.u32 %s97, 1
          %s463 = smul.addr %s462, 64
          %s464 = scalar_lea.vmem [#allocation5], %s463
          %466 = dma.done %s461, 1024
        $region48: #{tpu_custom_call.1} parent=43 // pred_fallthru
          _
      $region44: #{tpu_custom_call.1} parent=5 // pred_fallthru
        _
    $region6: #{tpu_custom_call.1} parent=1 // loop_footer
      %s19 = sadd.s32 1, %s15
    $region7: #{tpu_custom_call.1} parent=1 // loop_footer_branch
      %14 = sbr.rel target = $region3
    $region8: #{tpu_custom_call.1} parent=1 // loop_exit
      _
    %467 = vsyncpa [#allocation3], 1
    %s468 = scalar_lea.sflag [#allocation3], 1
    %469 = vsyncpa %s468, 1
    %470 = vsyncpa [#allocation4], 1
    %s471 = scalar_lea.sflag [#allocation4], 1
    %472 = vsyncpa %s471, 1

</llo_original>
